<compile_context>
chip_gen: v7x
topology: tpu7x:2x2x1
jax: 0.10.0
libtpu: 0.0.40
codegen_flags: <defaults>
</compile_context>

<pallas_src>
import jax
import jax.numpy as jnp
from jax.experimental import pallas as pl
from jax.experimental.pallas import tpu as pltpu

EPS = 1e-6
_VMEM_LIMIT_BYTES = 48 * 1024 * 1024   # > default scoped limit, < v7x 64 MiB physical


# --------------------------------------------------------------------------
# Kernel 1: silu(emb) @ W + b, tiled over the 6*D output columns.
# --------------------------------------------------------------------------
def _silu_proj_kernel(emb_ref, w_ref, b_ref, proj_ref, silu_ref):
    # Hoist silu(emb) out of the column-tile loop: the inner grid axis is
    # "arbitrary" (serial per core), so program_id(1) == 0 runs exactly once
    # per TensorCore and the VMEM scratch persists across its column sweep.
    @pl.when(pl.program_id(1) == 0)
    def _():
        emb = emb_ref[...].astype(jnp.float32)
        silu_ref[...] = (emb * jax.nn.sigmoid(emb)).astype(silu_ref.dtype)

    # Feed the MXU in the weight's native dtype (bf16 stays bf16), f32 accum.
    proj = jnp.dot(silu_ref[...], w_ref[...], preferred_element_type=jnp.float32)
    proj_ref[...] = (proj + b_ref[...].astype(jnp.float32)).astype(proj_ref.dtype)


def _choose_col_tile(D, N, itemsize, target=4 << 20):
    """Lane-aligned column tile for the (D, N) weight, around `target` bytes."""
    budget = max(128, (target // max(D * itemsize, 1)) // 128 * 128)
    cands = [t for t in range(128, min(budget, N) + 1, 128) if N % t == 0]
    if not cands:
        return N  # tiny / ragged N: single full-width tile (equals full dim)

    # Prefer: even tile count (grid splits across v7x's 2 TCs) > 256-aligned
    # (v6e/v7x MXU is 256x256) > largest tile.
    def score(t):
        return ((N // t) % 2 == 0, t % 256 == 0, t)

    return max(cands, key=score)


def _silu_proj(emb, w, b):
    """emb: (B, D), w: (D, 6D), b: (6D,) -> (B, 6D)."""
    B, D = emb.shape
    N = w.shape[1]
    itemsize = jnp.dtype(w.dtype).itemsize

    tn = _choose_col_tile(D, N, itemsize)
    n_tiles = N // tn
    n_outer = 2 if (n_tiles >= 2 and n_tiles % 2 == 0) else 1
    n_inner = n_tiles // n_outer

    b2 = b.reshape(1, N)

    def col(c, n):
        return c * n_inner + n

    return pl.pallas_call(
        _silu_proj_kernel,
        out_shape=jax.ShapeDtypeStruct((B, N), emb.dtype),
        grid_spec=pltpu.PrefetchScalarGridSpec(
            num_scalar_prefetch=0,
            grid=(n_outer, n_inner),
            in_specs=[
                pl.BlockSpec((B, D), lambda c, n: (0, 0)),          # emb (tiny)
                pl.BlockSpec((D, tn), lambda c, n: (0, col(c, n))),  # weight cols
                pl.BlockSpec((1, tn), lambda c, n: (0, col(c, n))),  # bias cols
            ],
            out_specs=pl.BlockSpec((B, tn), lambda c, n: (0, col(c, n))),
            scratch_shapes=[pltpu.VMEM((B, D), w.dtype)],            # silu(emb)
        ),
        compiler_params=pltpu.CompilerParams(
            dimension_semantics=("parallel", "arbitrary"),
            vmem_limit_bytes=_VMEM_LIMIT_BYTES),
    )(emb, w, b2)


# --------------------------------------------------------------------------
# Kernel 2: streaming LayerNorm + adaLN-zero modulation over (B, S) tiles.
# --------------------------------------------------------------------------
def _ln_modulate_kernel(x_ref, ops_ref, shift_ref, o_ref):
    x = x_ref[...].astype(jnp.float32)                  # (1, TS, D)
    # Two-pass centered statistics in f32 (cancellation-safe).
    mean = jnp.mean(x, axis=-1, keepdims=True)
    xc = x - mean
    var = jnp.mean(xc * xc, axis=-1, keepdims=True)
    x_norm = xc * jax.lax.rsqrt(var + EPS)

    low_prec = o_ref.dtype in (jnp.dtype(jnp.bfloat16), jnp.dtype(jnp.float16))
    if low_prec:
        # bf16 epilogue (v6e/v7x): run the modulation FMA in the output dtype,
        # halving VALU work; the downcast fuses with the store.
        ops = ops_ref[...].astype(o_ref.dtype)           # (1, 1, D)
        sh = shift_ref[...].astype(o_ref.dtype)          # (1, 1, D)
        o_ref[...] = x_norm.astype(o_ref.dtype) * ops + sh
    else:
        o_ref[...] = (x_norm * ops_ref[...] + shift_ref[...]).astype(o_ref.dtype)


def _choose_seq_tile(B, S, D, itemsize):
    """Sequence tile for a (1, ts, D) x block, ~3-4 MiB, sublane-aligned."""
    # Budget for f32 intermediates (upcast x, centered x, x_norm): keep the
    # raw tile a bit smaller for 16-bit inputs so total live VMEM stays well
    # under v7x's 64 MiB (48 MiB scoped limit here).
    target = (4 << 20) if itemsize >= 4 else (3 << 20)
    if S % 8 != 0:
        return S
    ts = (target // max(D * itemsize, 1)) // 8 * 8
    ts = max(8, min(ts, S))
    while S % ts != 0 and ts > 8:
        ts -= 8
    # Guarantee at least 2 grid steps where possible so both v7x TCs get work.
    n_steps = B * (-(-S // ts))
    if n_steps < 2 and S >= 16:
        ts = max(8, (S // 2) // 8 * 8)
    return ts


def _ln_modulate(x, one_plus_scale_f32, shift_f32):
    """x: (B, S, D); one_plus_scale/shift: (B, D) float32 -> (B, S, D)."""
    B, S, D = x.shape
    itemsize = jnp.dtype(x.dtype).itemsize

    ts = _choose_seq_tile(B, S, D, itemsize)
    grid = (B, pl.cdiv(S, ts))

    ops3 = one_plus_scale_f32.reshape(B, 1, D)
    sh3 = shift_f32.reshape(B, 1, D)

    return pl.pallas_call(
        _ln_modulate_kernel,
        out_shape=jax.ShapeDtypeStruct((B, S, D), x.dtype),
        grid_spec=pltpu.PrefetchScalarGridSpec(
            num_scalar_prefetch=0,
            grid=grid,
            in_specs=[
                pl.BlockSpec((1, ts, D), lambda b, s: (b, s, 0)),   # x tile
                pl.BlockSpec((1, 1, D), lambda b, s: (b, 0, 0)),    # 1+scale_msa (f32)
                pl.BlockSpec((1, 1, D), lambda b, s: (b, 0, 0)),    # shift_msa (f32)
            ],
            out_specs=pl.BlockSpec((1, ts, D), lambda b, s: (b, s, 0)),
        ),
        compiler_params=pltpu.CompilerParams(
            dimension_semantics=("parallel", "parallel"),
            vmem_limit_bytes=_VMEM_LIMIT_BYTES),
    )(x, ops3, sh3)


# --------------------------------------------------------------------------
# Public forward: AdaLayerNormZero(x, emb) -> (x_mod, gate_msa, shift_mlp,
#                                              scale_mlp, gate_mlp)
# --------------------------------------------------------------------------
@jax.jit
def ada_layer_norm_zero(x, emb, w, b):
    """x: (B, S, D); emb: (B, D); w: (D, 6D) pre-transposed; b: (6D,)."""
    proj = _silu_proj(emb, w, b)                         # (B, 6D)
    shift_msa, scale_msa, gate_msa, shift_mlp, scale_mlp, gate_mlp = (
        jnp.split(proj, 6, axis=1))

    # Keep (1 + scale_msa) and shift_msa in f32 (tiny (B, D) arrays): avoids a
    # bf16 round-trip and the per-tile upcast inside the streaming kernel.
    one_plus_scale = scale_msa.astype(jnp.float32) + 1.0
    shift_f32 = shift_msa.astype(jnp.float32)

    x_out = _ln_modulate(x, one_plus_scale, shift_f32)
    return x_out, gate_msa, shift_mlp, scale_mlp, gate_mlp


# --------------------------------------------------------------------------
# Pure-JAX reference for validation.
# --------------------------------------------------------------------------
def reference(x, emb, w, b):
    silu = emb * jax.nn.sigmoid(emb)
    proj = silu @ w + b
    D = x.shape[-1]
    shift_msa, scale_msa, gate_msa, shift_mlp, scale_mlp, gate_mlp = [
        proj[:, i * D:(i + 1) * D] for i in range(6)
    ]
    mean = jnp.mean(x, axis=-1, keepdims=True)
    var = jnp.mean((x - mean) ** 2, axis=-1, keepdims=True)
    xn = (x - mean) / jnp.sqrt(var + EPS)
    out = xn * (1.0 + scale_msa[:, None, :]) + shift_msa[:, None, :]
    return out, gate_msa, shift_mlp, scale_mlp, gate_mlp


if __name__ == "__main__":
    B, S, D = 2, 8, 32

    key = jax.random.PRNGKey(0)
    kx, ke, kw, kb = jax.random.split(key, 4)

    x = jax.random.normal(kx, (B, S, D), dtype=jnp.float32)
    emb = jax.random.normal(ke, (B, D), dtype=jnp.float32)
    # nn.Linear(dim, dim*6): torch weight is (6D, D); store transpose (D, 6D).
    bound = 1.0 / (D ** 0.5)
    w = jax.random.uniform(kw, (D, 6 * D), minval=-bound, maxval=bound,
                           dtype=jnp.float32)
    b = jax.random.uniform(kb, (6 * D,), minval=-bound, maxval=bound,
                           dtype=jnp.float32)

    refs = reference(x, emb, w, b)

    # float32 path
    outs = jax.block_until_ready(ada_layer_norm_zero(x, emb, w, b))
    for o, r in zip(outs, refs):
        assert jnp.allclose(o, r, atol=1e-4, rtol=1e-4), "f32 mismatch vs reference"

    # bfloat16 path (exercises the low-precision modulation epilogue)
    outs_bf = jax.block_until_ready(ada_layer_norm_zero(
        x.astype(jnp.bfloat16), emb.astype(jnp.bfloat16),
        w.astype(jnp.bfloat16), b.astype(jnp.bfloat16)))
    for o, r in zip(outs_bf, refs):
        assert jnp.allclose(o.astype(jnp.float32), r, atol=1e-1, rtol=1e-1), \
            "bf16 mismatch vs reference"

    print("KERNEL_OK")
</pallas_src>

<mosaic_0001>
module attributes {stable_mosaic.version = 11 : i64} {
  func.func @_silu_proj_kernel(%arg0: i32, %arg1: i32, %arg2: memref<2x32xf32, #tpu.memory_space<vmem>>, %arg3: memref<32x192xf32, #tpu.memory_space<vmem>>, %arg4: memref<1x192xf32, #tpu.memory_space<vmem>>, %arg5: memref<2x192xf32, #tpu.memory_space<vmem>>, %arg6: memref<2x32xf32, #tpu.memory_space<vmem>>) attributes {dimension_semantics = [#tpu.dimension_semantics<parallel>, #tpu.dimension_semantics<arbitrary>], iteration_bounds = array<i64: 1, 1>, scalar_prefetch = 0 : i64, scratch_operands = 1 : i64, tpu.core_type = #tpu.core_type<tc>, window_params = [{pipeline_mode = #tpu.pipeline_mode<synchronous>, transform_indices = @transform_0, window_bounds = array<i64: 2, 32>}, {transform_indices = @transform_1, window_bounds = array<i64: 32, 192>}, {transform_indices = @transform_2, window_bounds = array<i64: 1, 192>}, {transform_indices = @transform_3, window_bounds = array<i64: 2, 192>}]} {
    %c0_i32 = arith.constant 0 : i32
    %0 = arith.cmpi eq, %arg1, %c0_i32 : i32
    %1 = arith.extui %0 : i1 to i32
    %c0_i32_0 = arith.constant 0 : i32
    %2 = arith.cmpi ne, %1, %c0_i32_0 : i32
    scf.if %2 {
      %c0_8 = arith.constant 0 : index
      %c0_9 = arith.constant 0 : index
      %10 = vector.load %arg2[%c0_8, %c0_9] : memref<2x32xf32, #tpu.memory_space<vmem>>, vector<2x32xf32>
      %11 = arith.negf %10 : vector<2x32xf32>
      %12 = math.exp %11 : vector<2x32xf32>
      %cst_10 = arith.constant 1.000000e+00 : f32
      %13 = vector.broadcast %cst_10 : f32 to vector<2x32xf32>
      %14 = arith.addf %13, %12 : vector<2x32xf32>
      %15 = arith.divf %13, %14 : vector<2x32xf32>
      %16 = arith.mulf %10, %15 : vector<2x32xf32>
      %c0_11 = arith.constant 0 : index
      %c0_12 = arith.constant 0 : index
      %17 = vector.load %arg6[%c0_11, %c0_12] : memref<2x32xf32, #tpu.memory_space<vmem>>, vector<2x32xf32>
      tpu.vector_store %arg6[%c0_11, %c0_12], %16 {strides = array<i32>} : memref<2x32xf32, #tpu.memory_space<vmem>>, vector<2x32xf32>,
    } else {
    }
    %c0 = arith.constant 0 : index
    %c0_1 = arith.constant 0 : index
    %3 = vector.load %arg6[%c0, %c0_1] : memref<2x32xf32, #tpu.memory_space<vmem>>, vector<2x32xf32>
    %c0_2 = arith.constant 0 : index
    %c0_3 = arith.constant 0 : index
    %4 = vector.load %arg3[%c0_2, %c0_3] : memref<32x192xf32, #tpu.memory_space<vmem>>, vector<32x192xf32>
    %cst = arith.constant dense<0.000000e+00> : vector<2x192xf32>
    %5 = tpu.matmul %3, %4, %cst {dimension_numbers = #tpu.dot_dimension_numbers<[1], [0], [0], [1], [0, 0, 1, 1], [], []>} : vector<2x32xf32>, vector<32x192xf32>, vector<2x192xf32> -> vector<2x192xf32>
    %c0_4 = arith.constant 0 : index
    %c0_5 = arith.constant 0 : index
    %6 = vector.load %arg4[%c0_4, %c0_5] : memref<1x192xf32, #tpu.memory_space<vmem>>, vector<1x192xf32>
    %7 = vector.broadcast %6 : vector<1x192xf32> to vector<2x192xf32>
    %8 = arith.addf %5, %7 : vector<2x192xf32>
    %c0_6 = arith.constant 0 : index
    %c0_7 = arith.constant 0 : index
    %9 = vector.load %arg5[%c0_6, %c0_7] : memref<2x192xf32, #tpu.memory_space<vmem>>, vector<2x192xf32>
    tpu.vector_store %arg5[%c0_6, %c0_7], %8 {strides = array<i32>} : memref<2x192xf32, #tpu.memory_space<vmem>>, vector<2x192xf32>,
    return
  }
  func.func @transform_0(%arg0: i32, %arg1: i32) -> (i32, i32) {
    %c0_i32 = arith.constant 0 : i32
    %c0_i32_0 = arith.constant 0 : i32
    %c0_i32_1 = arith.constant 0 : i32
    return %c0_i32, %c0_i32_0 : i32, i32
  }
  func.func @transform_1(%arg0: i32, %arg1: i32) -> (i32, i32) {
    %c1_i32 = arith.constant 1 : i32
    %0 = arith.muli %arg0, %c1_i32 : i32
    %1 = arith.addi %0, %arg1 : i32
    %c0_i32 = arith.constant 0 : i32
    %c0_i32_0 = arith.constant 0 : i32
    return %c0_i32, %1 : i32, i32
  }
  func.func @transform_2(%arg0: i32, %arg1: i32) -> (i32, i32) {
    %c1_i32 = arith.constant 1 : i32
    %0 = arith.muli %arg0, %c1_i32 : i32
    %1 = arith.addi %0, %arg1 : i32
    %c0_i32 = arith.constant 0 : i32
    %c0_i32_0 = arith.constant 0 : i32
    return %c0_i32, %1 : i32, i32
  }
  func.func @transform_3(%arg0: i32, %arg1: i32) -> (i32, i32) {
    %c1_i32 = arith.constant 1 : i32
    %0 = arith.muli %arg0, %c1_i32 : i32
    %1 = arith.addi %0, %arg1 : i32
    %c0_i32 = arith.constant 0 : i32
    %c0_i32_0 = arith.constant 0 : i32
    return %c0_i32, %1 : i32, i32
  }
}

module attributes {stable_mosaic.version = 11 : i64} {
  func.func @_ln_modulate_kernel(%arg0: i32, %arg1: i32, %arg2: memref<1x8x32xf32, #tpu.memory_space<vmem>>, %arg3: memref<1x1x32xf32, #tpu.memory_space<vmem>>, %arg4: memref<1x1x32xf32, #tpu.memory_space<vmem>>, %arg5: memref<1x8x32xf32, #tpu.memory_space<vmem>>) attributes {dimension_semantics = [#tpu.dimension_semantics<parallel>, #tpu.dimension_semantics<parallel>], iteration_bounds = array<i64: 2, 1>, scalar_prefetch = 0 : i64, scratch_operands = 0 : i64, tpu.core_type = #tpu.core_type<tc>, window_params = [{transform_indices = @transform_0, window_bounds = array<i64: 1, 8, 32>}, {transform_indices = @transform_1, window_bounds = array<i64: 1, 1, 32>}, {transform_indices = @transform_2, window_bounds = array<i64: 1, 1, 32>}, {transform_indices = @transform_3, window_bounds = array<i64: 1, 8, 32>}]} {
    %c0 = arith.constant 0 : index
    %c0_0 = arith.constant 0 : index
    %c0_1 = arith.constant 0 : index
    %0 = vector.load %arg2[%c0, %c0_0, %c0_1] : memref<1x8x32xf32, #tpu.memory_space<vmem>>, vector<1x8x32xf32>
    %cst = arith.constant dense<0.000000e+00> : vector<1x8xf32>
    %1 = vector.multi_reduction <add>, %0, %cst [2] : vector<1x8x32xf32> to vector<1x8xf32>
    %2 = vector.shape_cast %1 : vector<1x8xf32> to vector<1x8x1xf32>
    %cst_2 = arith.constant 3.200000e+01 : f32
    %3 = vector.broadcast %cst_2 : f32 to vector<1x8x1xf32>
    %4 = arith.divf %2, %3 : vector<1x8x1xf32>
    %5 = vector.broadcast %4 : vector<1x8x1xf32> to vector<1x8x32xf32>
    %6 = arith.subf %0, %5 : vector<1x8x32xf32>
    %7 = arith.mulf %6, %6 : vector<1x8x32xf32>
    %cst_3 = arith.constant dense<0.000000e+00> : vector<1x8xf32>
    %8 = vector.multi_reduction <add>, %7, %cst_3 [2] : vector<1x8x32xf32> to vector<1x8xf32>
    %9 = vector.shape_cast %8 : vector<1x8xf32> to vector<1x8x1xf32>
    %cst_4 = arith.constant 3.200000e+01 : f32
    %10 = vector.broadcast %cst_4 : f32 to vector<1x8x1xf32>
    %11 = arith.divf %9, %10 : vector<1x8x1xf32>
    %cst_5 = arith.constant 9.99999997E-7 : f32
    %12 = vector.broadcast %cst_5 : f32 to vector<1x8x1xf32>
    %13 = arith.addf %11, %12 : vector<1x8x1xf32>
    %14 = math.rsqrt %13 : vector<1x8x1xf32>
    %15 = vector.broadcast %14 : vector<1x8x1xf32> to vector<1x8x32xf32>
    %16 = arith.mulf %6, %15 : vector<1x8x32xf32>
    %c0_6 = arith.constant 0 : index
    %c0_7 = arith.constant 0 : index
    %c0_8 = arith.constant 0 : index
    %17 = vector.load %arg3[%c0_6, %c0_7, %c0_8] : memref<1x1x32xf32, #tpu.memory_space<vmem>>, vector<1x1x32xf32>
    %18 = vector.broadcast %17 : vector<1x1x32xf32> to vector<1x8x32xf32>
    %19 = arith.mulf %16, %18 : vector<1x8x32xf32>
    %c0_9 = arith.constant 0 : index
    %c0_10 = arith.constant 0 : index
    %c0_11 = arith.constant 0 : index
    %20 = vector.load %arg4[%c0_9, %c0_10, %c0_11] : memref<1x1x32xf32, #tpu.memory_space<vmem>>, vector<1x1x32xf32>
    %21 = vector.broadcast %20 : vector<1x1x32xf32> to vector<1x8x32xf32>
    %22 = arith.addf %19, %21 : vector<1x8x32xf32>
    %c0_12 = arith.constant 0 : index
    %c0_13 = arith.constant 0 : index
    %c0_14 = arith.constant 0 : index
    %23 = vector.load %arg5[%c0_12, %c0_13, %c0_14] : memref<1x8x32xf32, #tpu.memory_space<vmem>>, vector<1x8x32xf32>
    tpu.vector_store %arg5[%c0_12, %c0_13, %c0_14], %22 {strides = array<i32>} : memref<1x8x32xf32, #tpu.memory_space<vmem>>, vector<1x8x32xf32>,
    return
  }
  func.func @transform_0(%arg0: i32, %arg1: i32) -> (i32, i32, i32) {
    %c0_i32 = arith.constant 0 : i32
    %c0_i32_0 = arith.constant 0 : i32
    return %arg0, %arg1, %c0_i32 : i32, i32, i32
  }
  func.func @transform_1(%arg0: i32, %arg1: i32) -> (i32, i32, i32) {
    %c0_i32 = arith.constant 0 : i32
    %c0_i32_0 = arith.constant 0 : i32
    %c0_i32_1 = arith.constant 0 : i32
    return %arg0, %c0_i32, %c0_i32_0 : i32, i32, i32
  }
  func.func @transform_2(%arg0: i32, %arg1: i32) -> (i32, i32, i32) {
    %c0_i32 = arith.constant 0 : i32
    %c0_i32_0 = arith.constant 0 : i32
    %c0_i32_1 = arith.constant 0 : i32
    return %arg0, %c0_i32, %c0_i32_0 : i32, i32, i32
  }
  func.func @transform_3(%arg0: i32, %arg1: i32) -> (i32, i32, i32) {
    %c0_i32 = arith.constant 0 : i32
    %c0_i32_0 = arith.constant 0 : i32
    return %arg0, %arg1, %c0_i32 : i32, i32, i32
  }
}

</mosaic_0001>

<llo_original>
// kernel: ada_layer_norm_zero.2
$region0: #{ada_layer_norm_zero.2}
  #allocation0 [shape = 'u32[]', space=smem, size = 0x4, offset = 0x4, fixed_abs, tag = 'smem constant byte address 0x4 - core index']
  #allocation1 [shape = 'u32[144,128]{1,0:T(1,128)}', space=vmem, size = 0x12000, scoped, tag = 'internal scratch']
  #allocation2 [shape = 'f32[2,32]{1,0:T(2,128)}', space=vmem, size = 0x400, scoped, tag = 'scratch operand']
  %s0 = inlined_call_operand.vmem [shape: f32[2,32], index: 0, kind: input, shape index: {}]
  %s1 = inlined_call_operand.hbm [shape: f32[32,192], index: 1, kind: input, shape index: {}]
  %s2 = inlined_call_operand.vmem [shape: f32[1,192], index: 2, kind: input, shape index: {}]
  %s3 = inlined_call_operand.vmem [shape: f32[2,192], index: 3, kind: output, shape index: {}]
  %s4 = sld [smem:[#allocation0]]
  $region30: #{ada_layer_norm_zero.2} parent=0
    _
  %s6 = ssub.s32 1, %s4
  %s7 = scalar_select 0, %s6, %s4
  $region1: #{ada_layer_norm_zero.2} parent=0
    #allocation3 [shape = 'u8[32768]{0}', space=vmem, size = 0x8000, scoped, tag = 'input window, operand 1, single buffered']
    #allocation4 [shape = 's32[1]{0}', space=sflag, size = 0x4, scoped, tag = 'scoped memory for ada_layer_norm_zero.2']
    %8 = vsyncpa [#allocation4], 0
    // Predicated region
    $region2: #{ada_layer_norm_zero.2} parent=1 // pred_check
      _
    $region3: #{ada_layer_norm_zero.2} parent=1 // pred_check_branch
      %10 = sbr.rel (0) target = $region5
    $region4: #{ada_layer_norm_zero.2} parent=1 // pred_region
      _
    $region5: #{ada_layer_norm_zero.2} parent=1 // pred_fallthru
      _
    // Predicated region
    $region6: #{ada_layer_norm_zero.2} parent=1 // pred_check
      _
    $region7: #{ada_layer_norm_zero.2} parent=1 // pred_check_branch
      %12 = sbr.rel (0) target = $region9
    $region8: #{ada_layer_norm_zero.2} parent=1 // pred_region
      %s13 = sadd.s32 0, 0
      %s14 = smul.u32 2, %s13
      %s16 = ssub.s32 1024, 1024
      %17 = vsyncadd [#allocation4], %s16
      %s18 = smul.addr %s14, 128
      %s19 = scalar_lea.hbm %s1, %s18
      %s20 = sshll.u32 [#allocation3], 4
      %s21 = int_to_ptr.vmem [resolvable:$true] %s20
      %26 = dma.hbm_to_vmem [thread:$0]  %s19, 1024, %s21, [#allocation4], 256, 256, 16
    $region9: #{ada_layer_norm_zero.2} parent=1 // pred_fallthru
      _
    // Predicated region
    $region10: #{ada_layer_norm_zero.2} parent=1 // pred_check
      _
    $region11: #{ada_layer_norm_zero.2} parent=1 // pred_check_branch
      %28 = sbr.rel (0) target = $region13
    $region12: #{ada_layer_norm_zero.2} parent=1 // pred_region
      %s29 = sadd.s32 0, 0
      %s30 = smul.u32 2, %s29
      %p31 = scmp.lt.s32.totalorder %s30, 1
      %s32 = scalar_select %p31, %s30, 1
      %s33 = scalar_lea.vmem %s2, %s32
      %s34 = sadd.s32 0, 0
      %s35 = smul.u32 2, %s34
    $region13: #{ada_layer_norm_zero.2} parent=1 // pred_fallthru
      _
    // Predicated region
    $region14: #{ada_layer_norm_zero.2} parent=1 // pred_check
      _
    $region15: #{ada_layer_norm_zero.2} parent=1 // pred_check_branch
      %37 = sbr.rel (0) target = $region17
    $region16: #{ada_layer_norm_zero.2} parent=1 // pred_region
      %38 = dma.done [#allocation4], 1024
    $region17: #{ada_layer_norm_zero.2} parent=1 // pred_fallthru
      _
    %s39 = sadd.s32 0, 0
    %s40 = smul.u32 2, %s39
    %p41 = scmp.lt.s32.totalorder %s40, 1
    %s42 = scalar_select %p41, %s40, 1
    %s43 = scalar_lea.vmem %s2, %s42
    %s44 = sadd.s32 0, 0
    %s45 = smul.u32 2, %s44
    %p46 = scmp.lt.s32.totalorder %s45, 1
    %s47 = scalar_select %p46, %s45, 1
    %s48 = smul.addr %s47, 2
    %s49 = scalar_lea.vmem %s3, %s48
    %s50 = sadd.s32 0, 0
    %s51 = smul.u32 2, %s50
    %s52 = sadd.s32 0, 0
    %s53 = smul.u32 2, %s52
    %p54 = scmp.lt.s32.totalorder %s53, 1
    %s55 = scalar_select %p54, %s53, 1
    %s56 = scalar_lea.vmem %s2, %s55
    %s57 = sadd.s32 0, 0
    %s58 = smul.u32 2, %s57
    %s59 = sadd.s32 0, 0
    %s60 = smul.u32 2, %s59
    %p61 = scmp.lt.s32.totalorder %s60, 1
    %s62 = scalar_select %p61, %s60, 1
    %s63 = smul.addr %s62, 2
    %s64 = scalar_lea.vmem %s3, %s63
    %s65 = sadd.s32 0, 0
    %s66 = smul.u32 2, %s65
    %p67 = scmp.eq.s32.totalorder 0, 0
    // Predicated region
    $region18: #{ada_layer_norm_zero.2} parent=1 // pred_check
      %p68 = pneg %p67
    $region19: #{ada_layer_norm_zero.2} parent=1 // pred_check_branch
      %70 = sbr.rel (%p68) target = $region21
    $region20: #{ada_layer_norm_zero.2} parent=1 // pred_region
      %v71 = vld [vmem:[%s0] sm:$0x3]
      %v72 = vxor.u32 %v71, 2147483648
      %v73 = vmul.f32 %v72, 1.442695
      %v74 = vpow.pop %v73
      %v75 = vadd.f32 %v74, 1.0
      %v76 = vrcp.pop %v75
      %v77 = vmul.f32 1.0, %v76
      %v78 = vmul.f32 %v71, %v77
      %vm79 = vcmask 254976
      %80 = vst.msk [vmem:[#allocation2] sm:$0x3] %vm79, %v78
    $region21: #{ada_layer_norm_zero.2} parent=1 // pred_fallthru
      _
    %v81 = vld [vmem:[#allocation2] sm:$0x3]
    %v82 = vld [vmem:[#allocation3] sm:$0xff]
    %v83 = vld [vmem:[#allocation3 + $0x8] sm:$0xff]
    %v84 = vld [vmem:[#allocation3 + $0x10] sm:$0xff]
    %v85 = vld [vmem:[#allocation3 + $0x18] sm:$0xff]
    %v86 = vld [vmem:[#allocation3 + $0x20] sm:$0xff]
    %v87 = vld [vmem:[#allocation3 + $0x28] sm:$0xff]
    %v88 = vld [vmem:[#allocation3 + $0x30] sm:$0xff]
    %v89 = vld [vmem:[#allocation3 + $0x38] sm:$0xff]
    %v90 = vld [vmem:[%s56] sm:$0x3]
    %v92 = vlaneseq
    %v93 = vshrl.u32 %v92, 7
    %v94 = vsub.s32 0, %v93
    %v95 = vrot.slane %v90, %v94
    %v96 = vlaneseq
    %v97 = vshrl.u32 %v96, 7
    %v98 = vsub.s32 1, %v97
    %v99 = vrot.slane %v90, %v98
    %vm102 = vcmask 261120
    %v104 = vsel %vm102, %v81, 0
    %106 = vmatprep.subr.mxu0 %v83
    %107 = vmatpush1.msra.mxu0 %v82
    %108 = vmatprep.subr.mxu0 %v85
    %109 = vmatpush1.msra.mxu0 %v84
    %110 = vmatprep.subr.mxu0 %v87
    %111 = vmatpush1.msra.mxu0 %v86
    %112 = vmatprep.subr.mxu0 %v89
    %113 = vmatpush1.msra.mxu0 %v88
    %114 = vmatprep.subr.mxu0 0.0
    %115 = vmatpush1.msra.mxu0 0.0
    %116 = vmatprep.subr.mxu0 0.0
    %117 = vmatpush1.msra.mxu0 0.0
    %118 = vmatprep.subr.mxu0 0.0
    %119 = vmatpush1.msra.mxu0 0.0
    %120 = vmatprep.subr.mxu0 0.0
    %121 = vmatpush1.msra.mxu0 0.0
    %122 = vmatprep.subr.mxu0 0.0
    %123 = vmatpush1.msra.mxu0 0.0
    %124 = vmatprep.subr.mxu0 0.0
    %125 = vmatpush1.msra.mxu0 0.0
    %126 = vmatprep.subr.mxu0 0.0
    %127 = vmatpush1.msra.mxu0 0.0
    %128 = vmatprep.subr.mxu0 0.0
    %129 = vmatpush1.msra.mxu0 0.0
    %130 = vmatprep.subr.mxu0 0.0
    %131 = vmatpush1.msra.mxu0 0.0
    %132 = vmatprep.subr.mxu0 0.0
    %133 = vmatpush1.msra.mxu0 0.0
    %134 = vmatprep.subr.mxu0 0.0
    %135 = vmatpush1.msra.mxu0 0.0
    %136 = vmatprep.subr.mxu0 0.0
    %137 = vmatpush1.msra.mxu0 0.0
    %138 = vmatprep.subr.mxu0 0.0
    %139 = vmatpush1.msra.mxu0 0.0
    %140 = vmatprep.subr.mxu0 0.0
    %141 = vmatpush1.msra.mxu0 0.0
    %142 = vmatprep.subr.mxu0 0.0
    %143 = vmatpush1.msra.mxu0 0.0
    %144 = vmatprep.subr.mxu0 0.0
    %145 = vmatpush1.msra.mxu0 0.0
    %146 = vmatprep.subr.mxu0 0.0
    %147 = vmatpush1.msra.mxu0 0.0
    %148 = vmatprep.subr.mxu0 0.0
    %149 = vmatpush1.msra.mxu0 0.0
    %150 = vmatprep.subr.mxu0 0.0
    %151 = vmatpush1.msra.mxu0 0.0
    %152 = vmatprep.subr.mxu0 0.0
    %153 = vmatpush1.msra.mxu0 0.0
    %154 = vmatprep.subr.mxu0 0.0
    %155 = vmatpush1.msra.mxu0 0.0
    %156 = vmatprep.subr.mxu0 0.0
    %157 = vmatpush1.msra.mxu0 0.0
    %158 = vmatprep.subr.mxu0 0.0
    %159 = vmatpush1.msra.mxu0 0.0
    %160 = vmatprep.subr.mxu0 0.0
    %161 = vmatpush1.msra.mxu0 0.0
    %162 = vmatprep.subr.mxu0 0.0
    %163 = vmatpush1.msra.mxu0 0.0
    %164 = vmatprep.subr.mxu0 0.0
    %165 = vmatpush1.msra.mxu0 0.0
    %166 = vmatprep.subr.mxu0 0.0
    %167 = vmatpush1.msra.mxu0 0.0
    %168 = vmatprep.subr.mxu0 0.0
    %169 = vmatpush1.msra.mxu0 0.0
    %170 = vmatprep.mubr.f32.mxu0 0.0
    %171 = vmatmul.mubr.f32.gmra.mrb[0].mxu0 %v104
    %v172 = vpop.f32.mrb[0].mxu0
    %v173 = vadd.f32 %v95, %v172
    %v174 = vpop.f32.mrb[0].mxu0
    %v175 = vadd.f32 %v99, %v174
    %176 = vdwg.mxu0
    %v179 = vcombine.low %v173, %v175
    %v181 = vunpack.c.l.s4 1983009808
    %v182 = vunpack.c.0.s8 %v181
    %v183 = vlaneseq
    %v184 = vshrl.u32 %v183, 7
    %v185 = vsub.s32 %v182, %v184
    %v186 = vrot.slane %v179, %v185
    %vm188 = vcmask 1041408
    %vm189 = vcmask 519170
    %vm190 = vmor %vm189, %vm188
    %191 = vst.msk [vmem:[%s64] sm:$0xf] %vm190, %v186
    %s192 = sadd.s32 0, 0
    %s193 = smul.u32 2, %s192
    %p194 = scmp.lt.s32.totalorder %s193, 1
    %s195 = scalar_select %p194, %s193, 1
    %s196 = smul.addr %s195, 2
    %s197 = scalar_lea.vmem %s3, %s196
    // Predicated region
    $region22: #{ada_layer_norm_zero.2} parent=1 // pred_check
      _
    $region23: #{ada_layer_norm_zero.2} parent=1 // pred_check_branch
      %199 = sbr.rel (0) target = $region25
    $region24: #{ada_layer_norm_zero.2} parent=1 // pred_region
      %s200 = sadd.s32 0, 0
      %s201 = smul.u32 2, %s200
    $region25: #{ada_layer_norm_zero.2} parent=1 // pred_fallthru
      _
    // Predicated region
    $region26: #{ada_layer_norm_zero.2} parent=1 // pred_check
      _
    $region27: #{ada_layer_norm_zero.2} parent=1 // pred_check_branch
      %203 = sbr.rel (0) target = $region29
    $region28: #{ada_layer_norm_zero.2} parent=1 // pred_region
      %s204 = sadd.s32 0, 0
      %s205 = smul.u32 2, %s204
      %p206 = scmp.lt.s32.totalorder %s205, 1
      %s207 = scalar_select %p206, %s205, 1
      %s208 = smul.addr %s207, 2
      %s209 = scalar_lea.vmem %s3, %s208
    $region29: #{ada_layer_norm_zero.2} parent=1 // pred_fallthru
      _
    %210 = vsyncpa [#allocation4], 1

// kernel: ada_layer_norm_zero.3
$region0: #{ada_layer_norm_zero.3}
  #allocation0 [shape = 'u32[]', space=smem, size = 0x4, offset = 0x4, fixed_abs, tag = 'smem constant byte address 0x4 - core index']
  #allocation1 [shape = 'u32[144,128]{1,0:T(1,128)}', space=vmem, size = 0x12000, scoped, tag = 'internal scratch']
  %s0 = inlined_call_operand.vmem [shape: f32[2,8,32], index: 0, kind: input, shape index: {}]
  %s1 = inlined_call_operand.vmem [shape: f32[2,1,32], index: 1, kind: input, shape index: {}]
  %s2 = inlined_call_operand.vmem [shape: f32[2,1,32], index: 2, kind: input, shape index: {}]
  %s3 = inlined_call_operand.hbm [shape: f32[2,8,32], index: 3, kind: output, shape index: {}]
  %s4 = sld [smem:[#allocation0]]
  $region45: #{ada_layer_norm_zero.3} parent=0
    _
  %s6 = ssub.s32 1, %s4
  %s7 = scalar_select 0, %s6, %s4
  $region1: #{ada_layer_norm_zero.3} parent=0
    #allocation2 [shape = 'u8[8192]{0}', space=vmem, size = 0x2000, scoped, tag = 'output window, operand 0']
    #allocation3 [shape = 's32[2]{0}', space=sflag, size = 0x8, scoped, tag = 'scoped memory for ada_layer_norm_zero.3']
    %8 = vsyncpa [#allocation3], 0
    %s9 = scalar_lea.sflag [#allocation3], 1
    %10 = vsyncpa %s9, 0
    loop: start=0, step=1, limit=4
    $region2: #{ada_layer_norm_zero.3} parent=1 // loop_pre_header
      _
    $region3: #{ada_layer_norm_zero.3} parent=1 // loop_header
      %s12 = sphi 0, %s16
      %p13 = scmp.ge.s32.totalorder %s12, 4
      %s19 = sphi 0, %s31
      %s20 = sphi 0, %s27
      %s21 = sphi 0, %s19
      %s22 = sphi 0, %s20
      %s23 = sphi 0, %s21
      %s24 = sphi 0, %s22
      %s36 = sphi 0, %s38
      %s39 = sphi 0, %s36
      %s40 = sphi 0, %s39
      %s56 = sphi 0, %s40
      %s62 = sphi 0, %s64
      %s65 = sphi 0, %s62
      %s66 = sphi 0, %s65
      %s82 = sphi 0, %s66
      %s88 = sphi 0, %s90
      %s91 = sphi 0, %s88
      %s92 = sphi 0, %s91
      %s108 = sphi 0, %s92
      %s116 = sphi 0, %s118
      %s119 = sphi 0, %s116
      %s120 = sphi 0, %s119
      %s136 = sphi 0, %s120
    $region4: #{ada_layer_norm_zero.3} parent=1 // loop_header_branch
      %15 = sbr.rel (%p13) target = $region8
    $region5: #{ada_layer_norm_zero.3} parent=1 // loop_body
      %s17 = ssub.s32 %s12, 1
      %s18 = ssub.s32 %s12, 2
      %s25 = sadd.s32 1, %s20
      %p26 = scmp.ge.s32.totalorder %s25, 1
      %s27 = scalar_select %p26, 0, %s25
      %s28 = sadd.s32 1, %s19
      %s29 = scalar_select %p26, %s28, %s19
      %p30 = scmp.ge.s32.totalorder %s29, 2
      %s31 = scalar_select %p30, 0, %s29
      %s32 = ssub.s32 %s19, %s31
      %s33 = ssub.s32 %s20, %s27
      %s34 = sor.u32 %s32, %s33
      %p35 = scmp.eq.s32.totalorder %s34, 0
      %s37 = sadd.s32 %s36, 1
      %s38 = scalar_select %p35, %s36, %s37
      %p41 = pneg %p35
      %p42 = scmp.eq.s32.totalorder %s12, 1
      %p43 = por %p41, %p42
      %p44 = scmp.ne.s32.totalorder %s36, %s39
      %p45 = scmp.eq.s32.totalorder %s12, 0
      %p46 = por %p44, %p45
      %p47 = scmp.ne.s32.totalorder %s36, %s39
      %p48 = scmp.eq.s32.totalorder %s17, 1
      %p49 = por %p47, %p48
      %p50 = scmp.ne.s32.totalorder %s39, %s40
      %p51 = scmp.eq.s32.totalorder %s17, 0
      %p52 = por %p50, %p51
      %p53 = scmp.ne.s32.totalorder %s39, %s40
      %p54 = scmp.eq.s32.totalorder %s18, 1
      %p55 = por %p53, %p54
      %p57 = scmp.ne.s32.totalorder %s40, %s56
      %p58 = scmp.eq.s32.totalorder %s18, 0
      %p59 = por %p57, %p58
      %s60 = ssub.s32 %s19, %s31
      %p61 = scmp.eq.s32.totalorder %s60, 0
      %s63 = sadd.s32 %s62, 1
      %s64 = scalar_select %p61, %s62, %s63
      %p67 = pneg %p61
      %p68 = scmp.eq.s32.totalorder %s12, 1
      %p69 = por %p67, %p68
      %p70 = scmp.ne.s32.totalorder %s62, %s65
      %p71 = scmp.eq.s32.totalorder %s12, 0
      %p72 = por %p70, %p71
      %p73 = scmp.ne.s32.totalorder %s62, %s65
      %p74 = scmp.eq.s32.totalorder %s17, 1
      %p75 = por %p73, %p74
      %p76 = scmp.ne.s32.totalorder %s65, %s66
      %p77 = scmp.eq.s32.totalorder %s17, 0
      %p78 = por %p76, %p77
      %p79 = scmp.ne.s32.totalorder %s65, %s66
      %p80 = scmp.eq.s32.totalorder %s18, 1
      %p81 = por %p79, %p80
      %p83 = scmp.ne.s32.totalorder %s66, %s82
      %p84 = scmp.eq.s32.totalorder %s18, 0
      %p85 = por %p83, %p84
      %s86 = ssub.s32 %s19, %s31
      %p87 = scmp.eq.s32.totalorder %s86, 0
      %s89 = sadd.s32 %s88, 1
      %s90 = scalar_select %p87, %s88, %s89
      %p93 = pneg %p87
      %p94 = scmp.eq.s32.totalorder %s12, 1
      %p95 = por %p93, %p94
      %p96 = scmp.ne.s32.totalorder %s88, %s91
      %p97 = scmp.eq.s32.totalorder %s12, 0
      %p98 = por %p96, %p97
      %p99 = scmp.ne.s32.totalorder %s88, %s91
      %p100 = scmp.eq.s32.totalorder %s17, 1
      %p101 = por %p99, %p100
      %p102 = scmp.ne.s32.totalorder %s91, %s92
      %p103 = scmp.eq.s32.totalorder %s17, 0
      %p104 = por %p102, %p103
      %p105 = scmp.ne.s32.totalorder %s91, %s92
      %p106 = scmp.eq.s32.totalorder %s18, 1
      %p107 = por %p105, %p106
      %p109 = scmp.ne.s32.totalorder %s92, %s108
      %p110 = scmp.eq.s32.totalorder %s18, 0
      %p111 = por %p109, %p110
      %s112 = ssub.s32 %s19, %s31
      %s113 = ssub.s32 %s20, %s27
      %s114 = sor.u32 %s112, %s113
      %p115 = scmp.eq.s32.totalorder %s114, 0
      %s117 = sadd.s32 %s116, 1
      %s118 = scalar_select %p115, %s116, %s117
      %p121 = pneg %p115
      %p122 = scmp.eq.s32.totalorder %s12, 1
      %p123 = por %p121, %p122
      %p124 = scmp.ne.s32.totalorder %s116, %s119
      %p125 = scmp.eq.s32.totalorder %s12, 0
      %p126 = por %p124, %p125
      %p127 = scmp.ne.s32.totalorder %s116, %s119
      %p128 = scmp.eq.s32.totalorder %s17, 1
      %p129 = por %p127, %p128
      %p130 = scmp.ne.s32.totalorder %s119, %s120
      %p131 = scmp.eq.s32.totalorder %s17, 0
      %p132 = por %p130, %p131
      %p133 = scmp.ne.s32.totalorder %s119, %s120
      %p134 = scmp.eq.s32.totalorder %s18, 1
      %p135 = por %p133, %p134
      %p137 = scmp.ne.s32.totalorder %s120, %s136
      %p138 = scmp.eq.s32.totalorder %s18, 0
      %p139 = por %p137, %p138
      %p140 = scmp.le.s32.totalorder 1, %s12
      %p141 = scmp.lt.s32.totalorder %s12, 3
      %p142 = pnand %p140, %p141
      %p143 = pneg %p142
      // Predicated region
      $region9: #{ada_layer_norm_zero.3} parent=5 // pred_check
        _
      $region10: #{ada_layer_norm_zero.3} parent=5 // pred_check_branch
        %145 = sbr.rel (%p142) target = $region12
      $region11: #{ada_layer_norm_zero.3} parent=5 // pred_region
        %s146 = ssub.s32 %s12, 1
      $region12: #{ada_layer_norm_zero.3} parent=5 // pred_fallthru
        _
      %p147 = scmp.lt.s32.totalorder %s12, 2
      // Predicated region
      $region13: #{ada_layer_norm_zero.3} parent=5 // pred_check
        %p148 = pneg %p147
      $region14: #{ada_layer_norm_zero.3} parent=5 // pred_check_branch
        %150 = sbr.rel (%p148) target = $region16
      $region15: #{ada_layer_norm_zero.3} parent=5 // pred_region
        // Predicated region
        $region17: #{ada_layer_norm_zero.3} parent=15 // pred_check
          %p151 = pneg %p46
        $region18: #{ada_layer_norm_zero.3} parent=15 // pred_check_branch
          %153 = sbr.rel (%p151) target = $region20
        $region19: #{ada_layer_norm_zero.3} parent=15 // pred_region
          %p154 = scmp.lt.s32.totalorder %s19, 1
          %s155 = scalar_select %p154, %s19, 1
          %p156 = scmp.lt.s32.totalorder %s20, 0
          %s157 = scalar_select %p156, %s20, 0
          %s158 = sadd.s32 %s157, %s155
          %s159 = smul.addr %s158, 8
          %s160 = scalar_lea.vmem %s0, %s159
        $region20: #{ada_layer_norm_zero.3} parent=15 // pred_fallthru
          _
        // Predicated region
        $region21: #{ada_layer_norm_zero.3} parent=15 // pred_check
          %p161 = pneg %p72
        $region22: #{ada_layer_norm_zero.3} parent=15 // pred_check_branch
          %163 = sbr.rel (%p161) target = $region24
        $region23: #{ada_layer_norm_zero.3} parent=15 // pred_region
          %p164 = scmp.lt.s32.totalorder %s19, 1
          %s165 = scalar_select %p164, %s19, 1
          %s166 = scalar_lea.vmem %s1, %s165
        $region24: #{ada_layer_norm_zero.3} parent=15 // pred_fallthru
          _
        // Predicated region
        $region25: #{ada_layer_norm_zero.3} parent=15 // pred_check
          %p167 = pneg %p98
        $region26: #{ada_layer_norm_zero.3} parent=15 // pred_check_branch
          %169 = sbr.rel (%p167) target = $region28
        $region27: #{ada_layer_norm_zero.3} parent=15 // pred_region
          %p170 = scmp.lt.s32.totalorder %s19, 1
          %s171 = scalar_select %p170, %s19, 1
          %s172 = scalar_lea.vmem %s2, %s171
        $region28: #{ada_layer_norm_zero.3} parent=15 // pred_fallthru
          _
      $region16: #{ada_layer_norm_zero.3} parent=5 // pred_fallthru
        _
      %p173 = scmp.le.s32.totalorder 1, %s12
      %p174 = scmp.lt.s32.totalorder %s12, 3
      %p175 = pnand %p173, %p174
      %p176 = pneg %p175
      // Predicated region
      $region29: #{ada_layer_norm_zero.3} parent=5 // pred_check
        _
      $region30: #{ada_layer_norm_zero.3} parent=5 // pred_check_branch
        %178 = sbr.rel (%p175) target = $region32
      $region31: #{ada_layer_norm_zero.3} parent=5 // pred_region
        %s179 = ssub.s32 %s12, 1
        %p180 = scmp.lt.s32.totalorder %s21, 1
        %s181 = scalar_select %p180, %s21, 1
        %p182 = scmp.lt.s32.totalorder %s22, 0
        %s183 = scalar_select %p182, %s22, 0
        %s184 = sadd.s32 %s183, %s181
        %s185 = smul.addr %s184, 8
        %s186 = scalar_lea.vmem %s0, %s185
        %p187 = pneg %p52
        %p188 = pneg %p49
        %p189 = scmp.lt.s32.totalorder %s21, 1
        %s190 = scalar_select %p189, %s21, 1
        %s191 = scalar_lea.vmem %s1, %s190
        %p192 = pneg %p78
        %p193 = pneg %p75
        %p194 = scmp.lt.s32.totalorder %s21, 1
        %s195 = scalar_select %p194, %s21, 1
        %s196 = scalar_lea.vmem %s2, %s195
        %p197 = pneg %p104
        %p198 = pneg %p101
        %p199 = pneg %p132
        %p200 = pneg %p129
        %s201 = sand.u32 %s119, 1
        %s202 = scalar_lea.sflag [#allocation3], %s201
        %s203 = sand.u32 %s119, 1
        %s204 = smul.addr %s203, 8
        %s205 = scalar_lea.vmem [#allocation2], %s204
        %p206 = scmp.lt.s32.totalorder %s21, 1
        %s207 = scalar_select %p206, %s21, 1
        %p208 = scmp.lt.s32.totalorder %s22, 0
        %s209 = scalar_select %p208, %s22, 0
        %s210 = sadd.s32 %s209, %s207
        %s211 = smul.addr %s210, 8
        %s212 = scalar_lea.vmem %s0, %s211
        %p213 = scmp.lt.s32.totalorder %s21, 1
        %s214 = scalar_select %p213, %s21, 1
        %s215 = scalar_lea.vmem %s1, %s214
        %p216 = scmp.lt.s32.totalorder %s21, 1
        %s217 = scalar_select %p216, %s21, 1
        %s218 = scalar_lea.vmem %s2, %s217
        %v219 = vld [vmem:[%s212] sm:$0xff]
        %vm220 = vcmask 261120
        %v221 = vsel %vm220, %v219, 0.0
        %222 = vadd.xlane.f32.xlu0 %v221
        %v223 = vpop.xlane.xlu0 %222
        %v224 = vrcp.pop 32.0
        %v225 = vmul.f32 %v223, %v224
        %v226 = vsub.f32 %v219, %v225
        %v227 = vmul.f32 %v226, %v226
        %v228 = vsel %vm220, %v227, 0.0
        %229 = vadd.xlane.f32.xlu0 %v228
        %v230 = vpop.xlane.xlu0 %229
        %v231 = vmul.f32 %v230, %v224
        %v232 = vadd.f32 %v231, 1e-06
        %v233 = vrsqrt.pop %v232
        %v234 = vmul.f32 %v226, %v233
        %v235 = vld [vmem:[%s215] sm:$0x1]
        %v237 = vlaneseq
        %v238 = vshrl.u32 %v237, 7
        %v239 = vsub.s32 0, %v238
        %v240 = vrot.slane %v235, %v239
        %v242 = vmul.f32 %v234, %v240
        %v243 = vld [vmem:[%s218] sm:$0x1]
        %v245 = vlaneseq
        %v246 = vshrl.u32 %v245, 7
        %v247 = vsub.s32 0, %v246
        %v248 = vrot.slane %v243, %v247
        %v250 = vadd.f32 %v242, %v248
        %251 = vst.msk [vmem:[%s205] sm:$0xff] %vm220, %v250
        %s252 = sand.u32 %s119, 1
        %s253 = scalar_lea.sflag [#allocation3], %s252
        %s254 = sand.u32 %s119, 1
        %s255 = smul.addr %s254, 8
        %s256 = scalar_lea.vmem [#allocation2], %s255
        // Predicated region
        $region33: #{ada_layer_norm_zero.3} parent=31 // pred_check
          %p257 = pneg %p129
        $region34: #{ada_layer_norm_zero.3} parent=31 // pred_check_branch
          %259 = sbr.rel (%p257) target = $region36
        $region35: #{ada_layer_norm_zero.3} parent=31 // pred_region
          %s261 = ssub.s32 128, 128
          %262 = vsyncadd %s253, %s261
          %s263 = sadd.s32 %s22, %s21
          %s264 = smul.addr %s263, 128
          %s265 = scalar_lea.hbm %s3, %s264
          %s267 = sshll.u32 %s256, 4
          %s268 = int_to_ptr.vmem [resolvable:$true] %s267
          %270 = dma.vmem_to_hbm [thread:$0]  %s268, 128, %s265, %s253
        $region36: #{ada_layer_norm_zero.3} parent=31 // pred_fallthru
          _
      $region32: #{ada_layer_norm_zero.3} parent=5 // pred_fallthru
        _
      %p271 = scmp.le.s32.totalorder 2, %s12
      // Predicated region
      $region37: #{ada_layer_norm_zero.3} parent=5 // pred_check
        %p272 = pneg %p271
      $region38: #{ada_layer_norm_zero.3} parent=5 // pred_check_branch
        %274 = sbr.rel (%p272) target = $region40
      $region39: #{ada_layer_norm_zero.3} parent=5 // pred_region
        %s275 = ssub.s32 %s12, 2
        // Predicated region
        $region41: #{ada_layer_norm_zero.3} parent=39 // pred_check
          %p276 = pneg %p135
        $region42: #{ada_layer_norm_zero.3} parent=39 // pred_check_branch
          %278 = sbr.rel (%p276) target = $region44
        $region43: #{ada_layer_norm_zero.3} parent=39 // pred_region
          %s279 = sand.u32 %s120, 1
          %s280 = scalar_lea.sflag [#allocation3], %s279
          %s281 = sand.u32 %s120, 1
          %s282 = smul.addr %s281, 8
          %s283 = scalar_lea.vmem [#allocation2], %s282
          %284 = dma.done %s280, 128
        $region44: #{ada_layer_norm_zero.3} parent=39 // pred_fallthru
          _
      $region40: #{ada_layer_norm_zero.3} parent=5 // pred_fallthru
        _
    $region6: #{ada_layer_norm_zero.3} parent=1 // loop_footer
      %s16 = sadd.s32 1, %s12
    $region7: #{ada_layer_norm_zero.3} parent=1 // loop_footer_branch
      %11 = sbr.rel target = $region3
    $region8: #{ada_layer_norm_zero.3} parent=1 // loop_exit
      _
    %285 = vsyncpa [#allocation3], 1
    %s286 = scalar_lea.sflag [#allocation3], 1
    %287 = vsyncpa %s286, 1

</llo_original>
